<compile_context>
chip_gen: v7x
topology: tpu7x:2x2x1
jax: 0.10.0
libtpu: 0.0.40
codegen_flags: <defaults>
</compile_context>

<pallas_src>
import numpy as np
import jax
import jax.numpy as jnp
from jax.experimental import pallas as pl
from jax.experimental.pallas import tpu as pltpu


def _round_up(x, m):
    return ((x + m - 1) // m) * m


# ----------------------------------------------------------------------------
# Parameter-free "weights": scaled bin centers.  Computed in numpy float64 to
# match PyTorch's .double() inside _linear_to_scaled, then cast to float32.
# ----------------------------------------------------------------------------
def _linear_to_scaled_np(a, eps):
    sign = np.sign(a)
    a = np.abs(a).astype(np.float64)
    x = sign * (2.0 * (a + 1.0) * eps
                - np.sqrt(4.0 * eps * (a + eps + 1.0) + 1.0) + 1.0) / (2.0 * eps ** 2)
    return x.astype(np.float32)


def make_scaled_bin_centers(approx_max, num_bins, eps=1e-6):
    limit = approx_max ** 0.5
    lin = np.linspace(-limit, limit, num_bins, dtype=np.float32)
    return _linear_to_scaled_np(lin, eps)[None, :]          # (1, N) float32


# ----------------------------------------------------------------------------
# Pallas kernel: fused, numerically-stable softmax expectation over the bins.
#   bins_ref : (TILE_R, N)  logits tile (f32 or bf16)
#   w_ref    : (1, N) f32   scaled bin centers (resident across the grid)
#   out_ref  : (TILE_R, 1)  expected values for this tile
# All reductions are exact f32 (VPU multiply + masked XLU lane reductions);
# exp runs on the EUP; no MXU involvement so no bf16 truncation.
# ----------------------------------------------------------------------------
def _cat_value_kernel(bins_ref, w_ref, out_ref):
    x = bins_ref[...].astype(jnp.float32)                   # (TILE_R, N)
    w = w_ref[...]                                          # (1, N) f32
    m = jnp.max(x, axis=-1, keepdims=True)                  # (TILE_R, 1)  stable softmax
    e = jnp.exp(x - m)                                      # (TILE_R, N)  EUP
    num = jnp.sum(e * w, axis=-1, keepdims=True)            # (TILE_R, 1)  exact f32
    den = jnp.sum(e, axis=-1, keepdims=True)                # (TILE_R, 1)  exact f32
    out_ref[...] = (num / den).astype(out_ref.dtype)        # exact divide


def categorical_value_encode(bins, approx_max, num_bins, eps=1e-6, tile_rows=8192):
    """JAX/Pallas equivalent of CategoricalValueEncoder.forward."""
    assert bins.shape[-1] == num_bins
    lead_shape = bins.shape[:-1]
    R = int(np.prod(lead_shape)) if lead_shape else 1
    N = num_bins

    # Row tile: a multiple of 128, but never more than ceil(R/2) (rounded up)
    # so the parallel grid axis has >= 2 steps whenever R is big enough — this
    # keeps both TensorCores busy on v7x.  No input padding: the ragged last
    # block is read with don't-care rows that only affect discarded outputs.
    req = _round_up(max(int(tile_rows), 128), 128)
    half = _round_up(pl.cdiv(R, 2), 128)
    tile_r = max(128, min(req, half))
    num_tiles = pl.cdiv(R, tile_r)

    bins2d = bins.reshape(R, N)
    centers = jnp.asarray(make_scaled_bin_centers(approx_max, num_bins, eps),
                          dtype=jnp.float32)                 # (1, N), always f32

    # Scoped-VMEM budget: double-buffered input tile (lane-padded to 128) plus
    # double-buffered (tile_r, 1) output (also lane-padded), plus slack.
    itemsize = np.dtype(bins.dtype).itemsize
    in_buf = tile_r * _round_up(N, 128) * itemsize
    out_buf = tile_r * 128 * itemsize
    vmem_limit = int(min(2 * (in_buf + out_buf) + (4 << 20), 100 << 20))

    out = pl.pallas_call(
        _cat_value_kernel,
        out_shape=jax.ShapeDtypeStruct((num_tiles * tile_r, 1), bins.dtype),
        grid=(num_tiles,),
        in_specs=[
            pl.BlockSpec((tile_r, N), lambda i: (i, 0)),     # pipelined row tiles
            pl.BlockSpec((1, N), lambda i: (0, 0)),          # resident weights
        ],
        out_specs=pl.BlockSpec((tile_r, 1), lambda i: (i, 0)),
        compiler_params=pltpu.CompilerParams(
            dimension_semantics=("parallel",),               # rows independent
            vmem_limit_bytes=vmem_limit),
    )(bins2d, centers)

    return out[:R, 0].reshape(lead_shape)


# ----------------------------------------------------------------------------
# Pure-JAX reference (sanity check only).
# ----------------------------------------------------------------------------
def _reference(bins, approx_max, num_bins, eps=1e-6):
    w = jnp.asarray(make_scaled_bin_centers(approx_max, num_bins, eps))[0]
    p = jax.nn.softmax(bins.astype(jnp.float32), axis=-1)
    return jnp.sum(p * w, axis=-1).astype(bins.dtype)


if __name__ == "__main__":
    approx_max = 100.0
    num_bins = 51
    eps = 1e-6

    key = jax.random.PRNGKey(0)
    k1, k2 = jax.random.split(key)

    # Small shape consistent with the module: (batch=2, seq=8, num_bins=51).
    bins = jax.random.normal(k1, (2, 8, num_bins), dtype=jnp.float32) * 3.0
    value = jax.block_until_ready(
        categorical_value_encode(bins, approx_max, num_bins, eps))
    assert value.shape == bins.shape[:-1], (value.shape, bins.shape)
    ref = jax.block_until_ready(_reference(bins, approx_max, num_bins, eps))
    np.testing.assert_allclose(np.asarray(value), np.asarray(ref),
                               rtol=2e-3, atol=2e-3)

    # Second check: multi-tile grid with a ragged final block (R=300, tile=128).
    bins2 = jax.random.normal(k2, (3, 100, num_bins), dtype=jnp.float32) * 3.0
    value2 = jax.block_until_ready(
        categorical_value_encode(bins2, approx_max, num_bins, eps, tile_rows=128))
    assert value2.shape == bins2.shape[:-1], (value2.shape, bins2.shape)
    ref2 = jax.block_until_ready(_reference(bins2, approx_max, num_bins, eps))
    np.testing.assert_allclose(np.asarray(value2), np.asarray(ref2),
                               rtol=2e-3, atol=2e-3)

    print("KERNEL_OK")
</pallas_src>

<mosaic_0001>
module attributes {stable_mosaic.version = 11 : i64} {
  func.func @_cat_value_kernel(%arg0: i32, %arg1: memref<128x51xf32, #tpu.memory_space<vmem>>, %arg2: memref<1x51xf32, #tpu.memory_space<vmem>>, %arg3: memref<128x1xf32, #tpu.memory_space<vmem>>) attributes {dimension_semantics = [#tpu.dimension_semantics<parallel>], iteration_bounds = array<i64: 1>, scalar_prefetch = 0 : i64, scratch_operands = 0 : i64, tpu.core_type = #tpu.core_type<tc>, window_params = [{transform_indices = @transform_0, window_bounds = array<i64: 128, 51>}, {pipeline_mode = #tpu.pipeline_mode<synchronous>, transform_indices = @transform_1, window_bounds = array<i64: 1, 51>}, {transform_indices = @transform_2, window_bounds = array<i64: 128, 1>}]} {
    %c0 = arith.constant 0 : index
    %c0_0 = arith.constant 0 : index
    %0 = vector.load %arg1[%c0, %c0_0] : memref<128x51xf32, #tpu.memory_space<vmem>>, vector<128x51xf32>
    %c0_1 = arith.constant 0 : index
    %c0_2 = arith.constant 0 : index
    %1 = vector.load %arg2[%c0_1, %c0_2] : memref<1x51xf32, #tpu.memory_space<vmem>>, vector<1x51xf32>
    %cst = arith.constant dense<0xFF800000> : vector<128xf32>
    %2 = vector.multi_reduction <maximumf>, %0, %cst [1] : vector<128x51xf32> to vector<128xf32>
    %3 = vector.shape_cast %2 : vector<128xf32> to vector<128x1xf32>
    %4 = vector.broadcast %3 : vector<128x1xf32> to vector<128x51xf32>
    %5 = arith.subf %0, %4 : vector<128x51xf32>
    %6 = math.exp %5 : vector<128x51xf32>
    %7 = vector.broadcast %1 : vector<1x51xf32> to vector<128x51xf32>
    %8 = arith.mulf %6, %7 : vector<128x51xf32>
    %cst_3 = arith.constant dense<0.000000e+00> : vector<128xf32>
    %9 = vector.multi_reduction <add>, %8, %cst_3 [1] : vector<128x51xf32> to vector<128xf32>
    %10 = vector.shape_cast %9 : vector<128xf32> to vector<128x1xf32>
    %cst_4 = arith.constant dense<0.000000e+00> : vector<128xf32>
    %11 = vector.multi_reduction <add>, %6, %cst_4 [1] : vector<128x51xf32> to vector<128xf32>
    %12 = vector.shape_cast %11 : vector<128xf32> to vector<128x1xf32>
    %13 = arith.divf %10, %12 : vector<128x1xf32>
    %c0_5 = arith.constant 0 : index
    %c0_6 = arith.constant 0 : index
    %14 = vector.load %arg3[%c0_5, %c0_6] : memref<128x1xf32, #tpu.memory_space<vmem>>, vector<128x1xf32>
    tpu.vector_store %arg3[%c0_5, %c0_6], %13 {strides = array<i32>} : memref<128x1xf32, #tpu.memory_space<vmem>>, vector<128x1xf32>,
    return
  }
  func.func @transform_0(%arg0: i32) -> (i32, i32) {
    %c0_i32 = arith.constant 0 : i32
    %c0_i32_0 = arith.constant 0 : i32
    return %arg0, %c0_i32 : i32, i32
  }
  func.func @transform_1(%arg0: i32) -> (i32, i32) {
    %c0_i32 = arith.constant 0 : i32
    %c0_i32_0 = arith.constant 0 : i32
    %c0_i32_1 = arith.constant 0 : i32
    return %c0_i32, %c0_i32_0 : i32, i32
  }
  func.func @transform_2(%arg0: i32) -> (i32, i32) {
    %c0_i32 = arith.constant 0 : i32
    %c0_i32_0 = arith.constant 0 : i32
    return %arg0, %c0_i32 : i32, i32
  }
}

</mosaic_0001>

<llo_original>
// kernel: tpu_custom_call.1
$region0: #{tpu_custom_call.1}
  #allocation0 [shape = 'u32[]', space=smem, size = 0x4, offset = 0x4, fixed_abs, tag = 'smem constant byte address 0x4 - core index']
  #allocation1 [shape = 'u32[144,128]{1,0:T(1,128)}', space=vmem, size = 0x12000, scoped, tag = 'internal scratch']
  %s0 = inlined_call_operand.hbm [shape: f32[16,51], index: 0, kind: input, shape index: {}]
  %s1 = inlined_call_operand.vmem [shape: f32[1,51], index: 1, kind: input, shape index: {}]
  %s2 = inlined_call_operand.vmem [shape: f32[128,1], index: 2, kind: output, shape index: {}]
  %s3 = sld [smem:[#allocation0]]
  $region22: #{tpu_custom_call.1} parent=0
    _
  %s5 = ssub.s32 1, %s3
  %s6 = scalar_select 0, %s5, %s3
  $region1: #{tpu_custom_call.1} parent=0
    #allocation2 [shape = 'u8[65536]{0}', space=vmem, size = 0x10000, scoped, tag = 'input window, operand 0, single buffered']
    #allocation3 [shape = 's32[1]{0}', space=sflag, size = 0x4, scoped, tag = 'scoped memory for tpu_custom_call.1']
    %7 = vsyncpa [#allocation3], 0
    // Predicated region
    $region2: #{tpu_custom_call.1} parent=1 // pred_check
      _
    $region3: #{tpu_custom_call.1} parent=1 // pred_check_branch
      %9 = sbr.rel (0) target = $region5
    $region4: #{tpu_custom_call.1} parent=1 // pred_region
      %s11 = ssub.s32 2048, 256
      %12 = vsyncadd [#allocation3], %s11
      %s13 = sshll.u32 [#allocation2], 4
      %s14 = int_to_ptr.vmem [resolvable:$true] %s13
      %19 = dma.hbm_to_vmem [thread:$0]  %s0, 256, %s14, [#allocation3], 128, 128, 8
    $region5: #{tpu_custom_call.1} parent=1 // pred_fallthru
      _
    // Predicated region
    $region6: #{tpu_custom_call.1} parent=1 // pred_check
      _
    $region7: #{tpu_custom_call.1} parent=1 // pred_check_branch
      %21 = sbr.rel (0) target = $region9
    $region8: #{tpu_custom_call.1} parent=1 // pred_region
      _
    $region9: #{tpu_custom_call.1} parent=1 // pred_fallthru
      _
    // Predicated region
    $region10: #{tpu_custom_call.1} parent=1 // pred_check
      _
    $region11: #{tpu_custom_call.1} parent=1 // pred_check_branch
      %23 = sbr.rel (0) target = $region13
    $region12: #{tpu_custom_call.1} parent=1 // pred_region
      %24 = dma.done [#allocation3], 2048
    $region13: #{tpu_custom_call.1} parent=1 // pred_fallthru
      _
    %v25 = vld [vmem:[#allocation2] sm:$0xff]
    %v26 = vld [vmem:[#allocation2 + $0x8] sm:$0xff]
    %v27 = vld [vmem:[#allocation2 + $0x10] sm:$0xff]
    %v28 = vld [vmem:[#allocation2 + $0x18] sm:$0xff]
    %v29 = vld [vmem:[#allocation2 + $0x20] sm:$0xff]
    %v30 = vld [vmem:[#allocation2 + $0x28] sm:$0xff]
    %v31 = vld [vmem:[#allocation2 + $0x30] sm:$0xff]
    %v32 = vld [vmem:[#allocation2 + $0x38] sm:$0xff]
    %v33 = vld [vmem:[#allocation2 + $0x40] sm:$0xff]
    %v34 = vld [vmem:[#allocation2 + $0x48] sm:$0xff]
    %v35 = vld [vmem:[#allocation2 + $0x50] sm:$0xff]
    %v36 = vld [vmem:[#allocation2 + $0x58] sm:$0xff]
    %v37 = vld [vmem:[#allocation2 + $0x60] sm:$0xff]
    %v38 = vld [vmem:[#allocation2 + $0x68] sm:$0xff]
    %v39 = vld [vmem:[#allocation2 + $0x70] sm:$0xff]
    %v40 = vld [vmem:[#allocation2 + $0x78] sm:$0xff]
    %v41 = vld [vmem:[%s1] sm:$0x1]
    %vm42 = vcmask 416768
    %v43 = vsel %vm42, %v25, -inf
    %44 = vmax.xlane.f32.xlu0 %v43
    %v45 = vpop.xlane.xlu0 %44
    %v46 = vsel %vm42, %v26, -inf
    %47 = vmax.xlane.f32.xlu0 %v46
    %v48 = vpop.xlane.xlu0 %47
    %v49 = vsel %vm42, %v27, -inf
    %50 = vmax.xlane.f32.xlu0 %v49
    %v51 = vpop.xlane.xlu0 %50
    %v52 = vsel %vm42, %v28, -inf
    %53 = vmax.xlane.f32.xlu0 %v52
    %v54 = vpop.xlane.xlu0 %53
    %v55 = vsel %vm42, %v29, -inf
    %56 = vmax.xlane.f32.xlu0 %v55
    %v57 = vpop.xlane.xlu0 %56
    %v58 = vsel %vm42, %v30, -inf
    %59 = vmax.xlane.f32.xlu0 %v58
    %v60 = vpop.xlane.xlu0 %59
    %v61 = vsel %vm42, %v31, -inf
    %62 = vmax.xlane.f32.xlu0 %v61
    %v63 = vpop.xlane.xlu0 %62
    %v64 = vsel %vm42, %v32, -inf
    %65 = vmax.xlane.f32.xlu0 %v64
    %v66 = vpop.xlane.xlu0 %65
    %v67 = vsel %vm42, %v33, -inf
    %68 = vmax.xlane.f32.xlu0 %v67
    %v69 = vpop.xlane.xlu0 %68
    %v70 = vsel %vm42, %v34, -inf
    %71 = vmax.xlane.f32.xlu0 %v70
    %v72 = vpop.xlane.xlu0 %71
    %v73 = vsel %vm42, %v35, -inf
    %74 = vmax.xlane.f32.xlu0 %v73
    %v75 = vpop.xlane.xlu0 %74
    %v76 = vsel %vm42, %v36, -inf
    %77 = vmax.xlane.f32.xlu0 %v76
    %v78 = vpop.xlane.xlu0 %77
    %v79 = vsel %vm42, %v37, -inf
    %80 = vmax.xlane.f32.xlu0 %v79
    %v81 = vpop.xlane.xlu0 %80
    %v82 = vsel %vm42, %v38, -inf
    %83 = vmax.xlane.f32.xlu0 %v82
    %v84 = vpop.xlane.xlu0 %83
    %v85 = vsel %vm42, %v39, -inf
    %86 = vmax.xlane.f32.xlu0 %v85
    %v87 = vpop.xlane.xlu0 %86
    %v88 = vsel %vm42, %v40, -inf
    %89 = vmax.xlane.f32.xlu0 %v88
    %v90 = vpop.xlane.xlu0 %89
    %v91 = vsub.f32 %v25, %v45
    %v92 = vsub.f32 %v26, %v48
    %v93 = vsub.f32 %v27, %v51
    %v94 = vsub.f32 %v28, %v54
    %v95 = vsub.f32 %v29, %v57
    %v96 = vsub.f32 %v30, %v60
    %v97 = vsub.f32 %v31, %v63
    %v98 = vsub.f32 %v32, %v66
    %v99 = vsub.f32 %v33, %v69
    %v100 = vsub.f32 %v34, %v72
    %v101 = vsub.f32 %v35, %v75
    %v102 = vsub.f32 %v36, %v78
    %v103 = vsub.f32 %v37, %v81
    %v104 = vsub.f32 %v38, %v84
    %v105 = vsub.f32 %v39, %v87
    %v106 = vsub.f32 %v40, %v90
    %v107 = vmul.f32 %v91, 1.442695
    %v108 = vpow.pop %v107
    %v109 = vmul.f32 %v92, 1.442695
    %v110 = vpow.pop %v109
    %v111 = vmul.f32 %v93, 1.442695
    %v112 = vpow.pop %v111
    %v113 = vmul.f32 %v94, 1.442695
    %v114 = vpow.pop %v113
    %v115 = vmul.f32 %v95, 1.442695
    %v116 = vpow.pop %v115
    %v117 = vmul.f32 %v96, 1.442695
    %v118 = vpow.pop %v117
    %v119 = vmul.f32 %v97, 1.442695
    %v120 = vpow.pop %v119
    %v121 = vmul.f32 %v98, 1.442695
    %v122 = vpow.pop %v121
    %v123 = vmul.f32 %v99, 1.442695
    %v124 = vpow.pop %v123
    %v125 = vmul.f32 %v100, 1.442695
    %v126 = vpow.pop %v125
    %v127 = vmul.f32 %v101, 1.442695
    %v128 = vpow.pop %v127
    %v129 = vmul.f32 %v102, 1.442695
    %v130 = vpow.pop %v129
    %v131 = vmul.f32 %v103, 1.442695
    %v132 = vpow.pop %v131
    %v133 = vmul.f32 %v104, 1.442695
    %v134 = vpow.pop %v133
    %v135 = vmul.f32 %v105, 1.442695
    %v136 = vpow.pop %v135
    %v137 = vmul.f32 %v106, 1.442695
    %v138 = vpow.pop %v137
    %v140 = vlaneseq
    %v141 = vshrl.u32 %v140, 7
    %v142 = vsub.s32 0, %v141
    %v143 = vrot.slane %v41, %v142
    %v145 = vmul.f32 %v108, %v143
    %v146 = vmul.f32 %v110, %v143
    %v147 = vmul.f32 %v112, %v143
    %v148 = vmul.f32 %v114, %v143
    %v149 = vmul.f32 %v116, %v143
    %v150 = vmul.f32 %v118, %v143
    %v151 = vmul.f32 %v120, %v143
    %v152 = vmul.f32 %v122, %v143
    %v153 = vmul.f32 %v124, %v143
    %v154 = vmul.f32 %v126, %v143
    %v155 = vmul.f32 %v128, %v143
    %v156 = vmul.f32 %v130, %v143
    %v157 = vmul.f32 %v132, %v143
    %v158 = vmul.f32 %v134, %v143
    %v159 = vmul.f32 %v136, %v143
    %v160 = vmul.f32 %v138, %v143
    %v161 = vsel %vm42, %v145, 0.0
    %162 = vadd.xlane.f32.xlu0 %v161
    %v163 = vpop.xlane.xlu0 %162
    %v164 = vsel %vm42, %v146, 0.0
    %165 = vadd.xlane.f32.xlu0 %v164
    %v166 = vpop.xlane.xlu0 %165
    %v167 = vsel %vm42, %v147, 0.0
    %168 = vadd.xlane.f32.xlu0 %v167
    %v169 = vpop.xlane.xlu0 %168
    %v170 = vsel %vm42, %v148, 0.0
    %171 = vadd.xlane.f32.xlu0 %v170
    %v172 = vpop.xlane.xlu0 %171
    %v173 = vsel %vm42, %v149, 0.0
    %174 = vadd.xlane.f32.xlu0 %v173
    %v175 = vpop.xlane.xlu0 %174
    %v176 = vsel %vm42, %v150, 0.0
    %177 = vadd.xlane.f32.xlu0 %v176
    %v178 = vpop.xlane.xlu0 %177
    %v179 = vsel %vm42, %v151, 0.0
    %180 = vadd.xlane.f32.xlu0 %v179
    %v181 = vpop.xlane.xlu0 %180
    %v182 = vsel %vm42, %v152, 0.0
    %183 = vadd.xlane.f32.xlu0 %v182
    %v184 = vpop.xlane.xlu0 %183
    %v185 = vsel %vm42, %v153, 0.0
    %186 = vadd.xlane.f32.xlu0 %v185
    %v187 = vpop.xlane.xlu0 %186
    %v188 = vsel %vm42, %v154, 0.0
    %189 = vadd.xlane.f32.xlu0 %v188
    %v190 = vpop.xlane.xlu0 %189
    %v191 = vsel %vm42, %v155, 0.0
    %192 = vadd.xlane.f32.xlu0 %v191
    %v193 = vpop.xlane.xlu0 %192
    %v194 = vsel %vm42, %v156, 0.0
    %195 = vadd.xlane.f32.xlu0 %v194
    %v196 = vpop.xlane.xlu0 %195
    %v197 = vsel %vm42, %v157, 0.0
    %198 = vadd.xlane.f32.xlu0 %v197
    %v199 = vpop.xlane.xlu0 %198
    %v200 = vsel %vm42, %v158, 0.0
    %201 = vadd.xlane.f32.xlu0 %v200
    %v202 = vpop.xlane.xlu0 %201
    %v203 = vsel %vm42, %v159, 0.0
    %204 = vadd.xlane.f32.xlu0 %v203
    %v205 = vpop.xlane.xlu0 %204
    %v206 = vsel %vm42, %v160, 0.0
    %207 = vadd.xlane.f32.xlu0 %v206
    %v208 = vpop.xlane.xlu0 %207
    %v209 = vsel %vm42, %v108, 0.0
    %210 = vadd.xlane.f32.xlu0 %v209
    %v211 = vpop.xlane.xlu0 %210
    %v212 = vsel %vm42, %v110, 0.0
    %213 = vadd.xlane.f32.xlu0 %v212
    %v214 = vpop.xlane.xlu0 %213
    %v215 = vsel %vm42, %v112, 0.0
    %216 = vadd.xlane.f32.xlu0 %v215
    %v217 = vpop.xlane.xlu0 %216
    %v218 = vsel %vm42, %v114, 0.0
    %219 = vadd.xlane.f32.xlu0 %v218
    %v220 = vpop.xlane.xlu0 %219
    %v221 = vsel %vm42, %v116, 0.0
    %222 = vadd.xlane.f32.xlu0 %v221
    %v223 = vpop.xlane.xlu0 %222
    %v224 = vsel %vm42, %v118, 0.0
    %225 = vadd.xlane.f32.xlu0 %v224
    %v226 = vpop.xlane.xlu0 %225
    %v227 = vsel %vm42, %v120, 0.0
    %228 = vadd.xlane.f32.xlu0 %v227
    %v229 = vpop.xlane.xlu0 %228
    %v230 = vsel %vm42, %v122, 0.0
    %231 = vadd.xlane.f32.xlu0 %v230
    %v232 = vpop.xlane.xlu0 %231
    %v233 = vsel %vm42, %v124, 0.0
    %234 = vadd.xlane.f32.xlu0 %v233
    %v235 = vpop.xlane.xlu0 %234
    %v236 = vsel %vm42, %v126, 0.0
    %237 = vadd.xlane.f32.xlu0 %v236
    %v238 = vpop.xlane.xlu0 %237
    %v239 = vsel %vm42, %v128, 0.0
    %240 = vadd.xlane.f32.xlu0 %v239
    %v241 = vpop.xlane.xlu0 %240
    %v242 = vsel %vm42, %v130, 0.0
    %243 = vadd.xlane.f32.xlu0 %v242
    %v244 = vpop.xlane.xlu0 %243
    %v245 = vsel %vm42, %v132, 0.0
    %246 = vadd.xlane.f32.xlu0 %v245
    %v247 = vpop.xlane.xlu0 %246
    %v248 = vsel %vm42, %v134, 0.0
    %249 = vadd.xlane.f32.xlu0 %v248
    %v250 = vpop.xlane.xlu0 %249
    %v251 = vsel %vm42, %v136, 0.0
    %252 = vadd.xlane.f32.xlu0 %v251
    %v253 = vpop.xlane.xlu0 %252
    %v254 = vsel %vm42, %v138, 0.0
    %255 = vadd.xlane.f32.xlu0 %v254
    %v256 = vpop.xlane.xlu0 %255
    %v257 = vrcp.pop %v211
    %v258 = vmul.f32 %v163, %v257
    %v259 = vrcp.pop %v214
    %v260 = vmul.f32 %v166, %v259
    %v261 = vrcp.pop %v217
    %v262 = vmul.f32 %v169, %v261
    %v263 = vrcp.pop %v220
    %v264 = vmul.f32 %v172, %v263
    %v265 = vrcp.pop %v223
    %v266 = vmul.f32 %v175, %v265
    %v267 = vrcp.pop %v226
    %v268 = vmul.f32 %v178, %v267
    %v269 = vrcp.pop %v229
    %v270 = vmul.f32 %v181, %v269
    %v271 = vrcp.pop %v232
    %v272 = vmul.f32 %v184, %v271
    %v273 = vrcp.pop %v235
    %v274 = vmul.f32 %v187, %v273
    %v275 = vrcp.pop %v238
    %v276 = vmul.f32 %v190, %v275
    %v277 = vrcp.pop %v241
    %v278 = vmul.f32 %v193, %v277
    %v279 = vrcp.pop %v244
    %v280 = vmul.f32 %v196, %v279
    %v281 = vrcp.pop %v247
    %v282 = vmul.f32 %v199, %v281
    %v283 = vrcp.pop %v250
    %v284 = vmul.f32 %v202, %v283
    %v285 = vrcp.pop %v253
    %v286 = vmul.f32 %v205, %v285
    %v287 = vrcp.pop %v256
    %v288 = vmul.f32 %v208, %v287
    %vm289 = vcmask 7168
    %290 = vst.msk [vmem:[%s2] sm:$0xff] %vm289, %v258
    %291 = vst.msk [vmem:[%s2 + $0x8] sm:$0xff] %vm289, %v260
    %292 = vst.msk [vmem:[%s2 + $0x10] sm:$0xff] %vm289, %v262
    %293 = vst.msk [vmem:[%s2 + $0x18] sm:$0xff] %vm289, %v264
    %294 = vst.msk [vmem:[%s2 + $0x20] sm:$0xff] %vm289, %v266
    %295 = vst.msk [vmem:[%s2 + $0x28] sm:$0xff] %vm289, %v268
    %296 = vst.msk [vmem:[%s2 + $0x30] sm:$0xff] %vm289, %v270
    %297 = vst.msk [vmem:[%s2 + $0x38] sm:$0xff] %vm289, %v272
    %298 = vst.msk [vmem:[%s2 + $0x40] sm:$0xff] %vm289, %v274
    %299 = vst.msk [vmem:[%s2 + $0x48] sm:$0xff] %vm289, %v276
    %300 = vst.msk [vmem:[%s2 + $0x50] sm:$0xff] %vm289, %v278
    %301 = vst.msk [vmem:[%s2 + $0x58] sm:$0xff] %vm289, %v280
    %302 = vst.msk [vmem:[%s2 + $0x60] sm:$0xff] %vm289, %v282
    %303 = vst.msk [vmem:[%s2 + $0x68] sm:$0xff] %vm289, %v284
    %304 = vst.msk [vmem:[%s2 + $0x70] sm:$0xff] %vm289, %v286
    %305 = vst.msk [vmem:[%s2 + $0x78] sm:$0xff] %vm289, %v288
    // Predicated region
    $region14: #{tpu_custom_call.1} parent=1 // pred_check
      _
    $region15: #{tpu_custom_call.1} parent=1 // pred_check_branch
      %307 = sbr.rel (0) target = $region17
    $region16: #{tpu_custom_call.1} parent=1 // pred_region
      _
    $region17: #{tpu_custom_call.1} parent=1 // pred_fallthru
      _
    // Predicated region
    $region18: #{tpu_custom_call.1} parent=1 // pred_check
      _
    $region19: #{tpu_custom_call.1} parent=1 // pred_check_branch
      %309 = sbr.rel (0) target = $region21
    $region20: #{tpu_custom_call.1} parent=1 // pred_region
      _
    $region21: #{tpu_custom_call.1} parent=1 // pred_fallthru
      _
    %310 = vsyncpa [#allocation3], 1

</llo_original>
